<compile_context>
chip_gen: v6e
topology: v6e:2x2x1
jax: 0.10.0
libtpu: 0.0.40
codegen_flags: <defaults>
</compile_context>

<pallas_src>
import functools

import jax
import jax.numpy as jnp
from jax import lax
from jax.experimental import pallas as pl
from jax.experimental.pallas import tpu as pltpu


def _channel_mhsa_kernel(x_ref, w_ref, b_ref, mask_ref, o_ref, *,
                         scale, compute_dtype, reassociate):
    # x_ref:    (Bt, C, N)  batch block, compute_dtype
    # w_ref:    (C, C)      proj weight (PyTorch Linear: y = W @ x + b), compute_dtype
    # b_ref:    (C, N)      bias, pre-broadcast across lanes, f32
    # mask_ref: (C, C)      additive block-diagonal head mask (0 / -1e30), f32
    # o_ref:    (Bt, C, N)  output
    bt = x_ref.shape[0]
    w = w_ref[...]
    bias = b_ref[...]
    mask = mask_ref[...]

    def one_batch(i):
        x = x_ref[i].astype(compute_dtype)                       # (C, N)
        # Gram over the spatial dim: contract N on both operands (no traced
        # transpose of x).  If a profile at very large N shows a materialized
        # relayout here, accumulate S over lane chunks of N instead.
        s = lax.dot_general(x, x, (((1,), (1,)), ((), ())),
                            preferred_element_type=jnp.float32)  # (C, C) f32
        s = s * scale + mask              # cross-head entries -> -1e30 pre-max
        m = jnp.max(s, axis=-1, keepdims=True)
        e = jnp.exp(s - m)
        denom = jnp.sum(e, axis=-1, keepdims=True)
        p = (e * pl.reciprocal(denom, approx=True)).astype(compute_dtype)
        if reassociate:
            # N > C: y = (W @ P) @ x  -- C^3 + C^2*N instead of 2*C^2*N MACs.
            wp = jnp.dot(w, p, preferred_element_type=jnp.float32)
            y = jnp.dot(wp.astype(compute_dtype), x,
                        preferred_element_type=jnp.float32)
        else:
            out = jnp.dot(p, x, preferred_element_type=jnp.float32)
            y = jnp.dot(w, out.astype(compute_dtype),
                        preferred_element_type=jnp.float32)
        o_ref[i] = (y + bias).astype(o_ref.dtype)

    if bt == 1:
        one_batch(0)
    else:
        # fori_loop (not a Python for) so vreg live ranges stay bounded per batch.
        def body(i, carry):
            one_batch(i)
            return carry
        lax.fori_loop(0, bt, body, 0)
    # TODO(synk): attn_drop / proj_drop are identity at inference (p = 0.0),
    # so dropout is omitted from the kernel.


def _vmem_footprint(bt, C, N, io_item, out_item, cd_item):
    blocks = 2 * bt * C * N * (io_item + out_item)           # double-buffered x + out
    consts = 2 * (C * C * io_item + C * C * 4 + C * N * 4)   # W + mask + bias
    temps = (4 * C * C * 4                                   # s / e / p / wp (f32)
             + 4 * C * N * 4                                 # x / out / y temporaries (f32)
             + 2 * (C * C + C * N) * cd_item)                # compute_dtype copies
    return blocks + consts + temps


def channel_mhsa(x, proj_w, proj_b, num_heads, qk_scale=None,
                 compute_dtype=jnp.bfloat16, out_dtype=None):
    """Forward pass of ChannelMultiHeadSelfAttention.

    x: (B, C, N); proj_w: (C, C) PyTorch Linear weight (out x in); proj_b: (C,).
    compute_dtype controls the HBM dtype of x / W and the MXU operand dtype;
    accumulation, softmax, mask and bias math stay float32.
    """
    B, C, N = x.shape
    head_dim = C // num_heads
    scale = float(qk_scale) if qk_scale is not None else head_dim ** (-0.5)
    if out_dtype is None:
        out_dtype = x.dtype           # keep module semantics (output dtype = input dtype)
    compute_dtype = jnp.dtype(compute_dtype)

    # HBM-boundary casts (in a real model these are no-ops / fused upstream).
    x_io = x if x.dtype == compute_dtype else x.astype(compute_dtype)
    w_io = proj_w if proj_w.dtype == compute_dtype else proj_w.astype(compute_dtype)

    # Additive block-diagonal head mask, applied BEFORE the row max so the
    # softmax normalisation only sees within-head entries.  Kept in f32.
    ch = jnp.arange(C, dtype=jnp.int32) // head_dim
    mask = jnp.where(ch[:, None] == ch[None, :], 0.0, -1e30).astype(jnp.float32)

    # Bias pre-broadcast across the lane (N) dim -> pure VPU add in-kernel.
    bias = jnp.broadcast_to(proj_b.astype(jnp.float32).reshape(C, 1), (C, N))

    # ---- per-generation block sizing ---------------------------------------
    try:
        capacity = int(pltpu.get_tpu_info().vmem_capacity_bytes)
    except Exception:
        capacity = 64 * 1024 * 1024      # conservative fallback: v7x per-core VMEM
    budget = int(0.55 * capacity)        # double-buffered blocks + temporaries
    cap = int(0.85 * capacity)           # never request (near-)physical VMEM

    io_item = compute_dtype.itemsize
    out_item = jnp.dtype(out_dtype).itemsize
    cd_item = compute_dtype.itemsize

    bt = 1
    if B > 1:
        # Largest divisor of B that fits the budget while keeping >= 2 grid
        # steps (v7x has two TensorCores; a 1-step grid idles one of them).
        for d in range(1, B // 2 + 1):
            if B % d == 0 and _vmem_footprint(d, C, N, io_item, out_item,
                                              cd_item) <= budget:
                bt = d
    grid = (B // bt,)

    footprint = _vmem_footprint(bt, C, N, io_item, out_item, cd_item)
    vmem_limit = min(cap, footprint + (8 << 20))
    if vmem_limit < footprint:
        # Shapes too large even at bt == 1: request the real footprint and
        # fail loudly rather than silently clamping below it.
        vmem_limit = footprint

    kernel = functools.partial(
        _channel_mhsa_kernel, scale=scale, compute_dtype=compute_dtype,
        reassociate=(N > C))

    return pl.pallas_call(
        kernel,
        out_shape=jax.ShapeDtypeStruct((B, C, N), out_dtype),
        grid_spec=pltpu.PrefetchScalarGridSpec(
            num_scalar_prefetch=0,
            grid=grid,
            in_specs=[
                # Note: raise pipeline depth (pipeline_mode=pl.Buffered(3)) on
                # x only if a profile shows exposed DMA; re-check VMEM on v7x.
                pl.BlockSpec((bt, C, N), lambda b: (b, 0, 0)),   # x
                pl.BlockSpec((C, C), lambda b: (0, 0)),          # W
                pl.BlockSpec((C, N), lambda b: (0, 0)),          # bias (broadcast)
                pl.BlockSpec((C, C), lambda b: (0, 0)),          # head mask
            ],
            out_specs=pl.BlockSpec((bt, C, N), lambda b: (b, 0, 0)),
        ),
        compiler_params=pltpu.CompilerParams(
            dimension_semantics=("parallel",),
            vmem_limit_bytes=int(vmem_limit)),
    )(x_io, w_io, bias, mask)


def _reference(x, proj_w, proj_b, num_heads, qk_scale=None):
    B, C, N = x.shape
    hd = C // num_heads
    scale = qk_scale if qk_scale is not None else hd ** (-0.5)
    xh = x.reshape(B, num_heads, hd, N)
    attn = jnp.einsum('bhdn,bhen->bhde', xh, xh) * scale
    attn = jax.nn.softmax(attn, axis=-1)
    out = jnp.einsum('bhde,bhen->bhdn', attn, xh).reshape(B, C, N)
    y = jnp.einsum('bcn,oc->bon', out, proj_w) + proj_b[None, :, None]
    return y


if __name__ == "__main__":
    def run_case(B, C, N, num_heads, compute_dtype, atol, rtol, key):
        kx, kw, kb = jax.random.split(key, 3)
        x = jax.random.normal(kx, (B, C, N), dtype=jnp.float32)
        proj_w = jax.random.normal(kw, (C, C), dtype=jnp.float32) * 0.02
        proj_b = jax.random.normal(kb, (C,), dtype=jnp.float32) * 0.02
        out = channel_mhsa(x, proj_w, proj_b, num_heads,
                           compute_dtype=compute_dtype)
        out = jax.block_until_ready(out)
        ref = _reference(x, proj_w, proj_b, num_heads)
        assert out.shape == (B, C, N)
        assert jnp.allclose(out, ref, atol=atol, rtol=rtol), \
            (f"B={B} C={C} N={N} dtype={compute_dtype}: "
             f"max abs diff {jnp.max(jnp.abs(out - ref))}")

    key = jax.random.PRNGKey(0)
    k1, k2 = jax.random.split(key)

    # f32 path: tight tolerance (only source of error is the approx EUP reciprocal).
    run_case(2, 64, 16, 8, jnp.float32, 2e-3, 2e-3, k1)
    # default bf16 I/O + MXU operands, small N (< C) -> W @ (P @ x) path, ragged lanes.
    run_case(2, 64, 16, 8, jnp.bfloat16, 3e-2, 3e-2, k1)
    # bf16, N > C -> reassociated (W @ P) @ x path, Bt = 2 batch-blocked grid.
    run_case(4, 64, 160, 8, jnp.bfloat16, 3e-2, 3e-2, k2)

    print("KERNEL_OK")
</pallas_src>

<mosaic_0001>
module attributes {stable_mosaic.version = 11 : i64} {
  func.func @_channel_mhsa_kernel(%arg0: i32, %arg1: memref<1x64x16xf32, #tpu.memory_space<vmem>>, %arg2: memref<64x64xf32, #tpu.memory_space<vmem>>, %arg3: memref<64x16xf32, #tpu.memory_space<vmem>>, %arg4: memref<64x64xf32, #tpu.memory_space<vmem>>, %arg5: memref<1x64x16xf32, #tpu.memory_space<vmem>>) attributes {dimension_semantics = [#tpu.dimension_semantics<parallel>], iteration_bounds = array<i64: 2>, scalar_prefetch = 0 : i64, scratch_operands = 0 : i64, tpu.core_type = #tpu.core_type<tc>, window_params = [{transform_indices = @transform_0, window_bounds = array<i64: 1, 64, 16>}, {pipeline_mode = #tpu.pipeline_mode<synchronous>, transform_indices = @transform_1, window_bounds = array<i64: 64, 64>}, {pipeline_mode = #tpu.pipeline_mode<synchronous>, transform_indices = @transform_2, window_bounds = array<i64: 64, 16>}, {pipeline_mode = #tpu.pipeline_mode<synchronous>, transform_indices = @transform_3, window_bounds = array<i64: 64, 64>}, {transform_indices = @transform_4, window_bounds = array<i64: 1, 64, 16>}]} {
    %c0 = arith.constant 0 : index
    %c0_0 = arith.constant 0 : index
    %0 = vector.load %arg2[%c0, %c0_0] : memref<64x64xf32, #tpu.memory_space<vmem>>, vector<64x64xf32>
    %c0_1 = arith.constant 0 : index
    %c0_2 = arith.constant 0 : index
    %1 = vector.load %arg3[%c0_1, %c0_2] : memref<64x16xf32, #tpu.memory_space<vmem>>, vector<64x16xf32>
    %c0_3 = arith.constant 0 : index
    %c0_4 = arith.constant 0 : index
    %2 = vector.load %arg4[%c0_3, %c0_4] : memref<64x64xf32, #tpu.memory_space<vmem>>, vector<64x64xf32>
    %c0_5 = arith.constant 0 : index
    %c0_6 = arith.constant 0 : index
    %c0_7 = arith.constant 0 : index
    %3 = vector.load %arg1[%c0_5, %c0_6, %c0_7] : memref<1x64x16xf32, #tpu.memory_space<vmem>>, vector<1x64x16xf32>
    %4 = vector.shape_cast %3 : vector<1x64x16xf32> to vector<64x16xf32>
    %cst = arith.constant dense<0.000000e+00> : vector<64x64xf32>
    %5 = tpu.matmul %4, %4, %cst {dimension_numbers = #tpu.dot_dimension_numbers<[1], [1], [0], [0], [0, 0, 1, 0], [], []>} : vector<64x16xf32>, vector<64x16xf32>, vector<64x64xf32> -> vector<64x64xf32>
    %cst_8 = arith.constant 0.353553385 : f32
    %6 = vector.broadcast %cst_8 : f32 to vector<64x64xf32>
    %7 = arith.mulf %5, %6 : vector<64x64xf32>
    %8 = arith.addf %7, %2 : vector<64x64xf32>
    %cst_9 = arith.constant dense<0xFF800000> : vector<64xf32>
    %9 = vector.multi_reduction <maximumf>, %8, %cst_9 [1] : vector<64x64xf32> to vector<64xf32>
    %10 = vector.shape_cast %9 : vector<64xf32> to vector<64x1xf32>
    %11 = vector.broadcast %10 : vector<64x1xf32> to vector<64x64xf32>
    %12 = arith.subf %8, %11 : vector<64x64xf32>
    %13 = math.exp %12 : vector<64x64xf32>
    %cst_10 = arith.constant dense<0.000000e+00> : vector<64xf32>
    %14 = vector.multi_reduction <add>, %13, %cst_10 [1] : vector<64x64xf32> to vector<64xf32>
    %15 = vector.shape_cast %14 : vector<64xf32> to vector<64x1xf32>
    %16 = tpu.reciprocal %15 {approx = true} : vector<64x1xf32> -> vector<64x1xf32>
    %17 = vector.broadcast %16 : vector<64x1xf32> to vector<64x64xf32>
    %18 = arith.mulf %13, %17 : vector<64x64xf32>
    %cst_11 = arith.constant dense<0.000000e+00> : vector<64x16xf32>
    %19 = tpu.matmul %18, %4, %cst_11 {dimension_numbers = #tpu.dot_dimension_numbers<[1], [0], [0], [1], [0, 0, 1, 1], [], []>} : vector<64x64xf32>, vector<64x16xf32>, vector<64x16xf32> -> vector<64x16xf32>
    %cst_12 = arith.constant dense<0.000000e+00> : vector<64x16xf32>
    %20 = tpu.matmul %0, %19, %cst_12 {dimension_numbers = #tpu.dot_dimension_numbers<[1], [0], [0], [1], [0, 0, 1, 1], [], []>} : vector<64x64xf32>, vector<64x16xf32>, vector<64x16xf32> -> vector<64x16xf32>
    %21 = arith.addf %20, %1 : vector<64x16xf32>
    %c0_13 = arith.constant 0 : index
    %c0_14 = arith.constant 0 : index
    %c0_15 = arith.constant 0 : index
    %22 = vector.load %arg5[%c0_13, %c0_14, %c0_15] : memref<1x64x16xf32, #tpu.memory_space<vmem>>, vector<1x64x16xf32>
    %23 = vector.shape_cast %22 : vector<1x64x16xf32> to vector<64x16xf32>
    %24 = vector.shape_cast %21 : vector<64x16xf32> to vector<1x64x16xf32>
    tpu.vector_store %arg5[%c0_13, %c0_14, %c0_15], %24 {strides = array<i32>} : memref<1x64x16xf32, #tpu.memory_space<vmem>>, vector<1x64x16xf32>,
    return
  }
  func.func @transform_0(%arg0: i32) -> (i32, i32, i32) {
    %c0_i32 = arith.constant 0 : i32
    %c0_i32_0 = arith.constant 0 : i32
    %c0_i32_1 = arith.constant 0 : i32
    return %arg0, %c0_i32, %c0_i32_0 : i32, i32, i32
  }
  func.func @transform_1(%arg0: i32) -> (i32, i32) {
    %c0_i32 = arith.constant 0 : i32
    %c0_i32_0 = arith.constant 0 : i32
    %c0_i32_1 = arith.constant 0 : i32
    return %c0_i32, %c0_i32_0 : i32, i32
  }
  func.func @transform_2(%arg0: i32) -> (i32, i32) {
    %c0_i32 = arith.constant 0 : i32
    %c0_i32_0 = arith.constant 0 : i32
    %c0_i32_1 = arith.constant 0 : i32
    return %c0_i32, %c0_i32_0 : i32, i32
  }
  func.func @transform_3(%arg0: i32) -> (i32, i32) {
    %c0_i32 = arith.constant 0 : i32
    %c0_i32_0 = arith.constant 0 : i32
    %c0_i32_1 = arith.constant 0 : i32
    return %c0_i32, %c0_i32_0 : i32, i32
  }
  func.func @transform_4(%arg0: i32) -> (i32, i32, i32) {
    %c0_i32 = arith.constant 0 : i32
    %c0_i32_0 = arith.constant 0 : i32
    %c0_i32_1 = arith.constant 0 : i32
    return %arg0, %c0_i32, %c0_i32_0 : i32, i32, i32
  }
}

</mosaic_0001>

<llo_original>
// kernel: tpu_custom_call.1
$region0: #{tpu_custom_call.1}
  #allocation0 [shape = 'u32[]', space=smem, size = 0x4, offset = 0x4, fixed_abs, tag = 'smem constant byte address 0x4 - core index']
  #allocation1 [shape = 'u32[144,128]{1,0:T(1,128)}', space=vmem, size = 0x12000, scoped, tag = 'internal scratch']
  %s0 = inlined_call_operand.vmem [shape: f32[2,64,16], index: 0, kind: input, shape index: {}]
  %s1 = inlined_call_operand.vmem [shape: f32[64,64], index: 1, kind: input, shape index: {}]
  %s2 = inlined_call_operand.vmem [shape: f32[64,16], index: 2, kind: input, shape index: {}]
  %s3 = inlined_call_operand.vmem [shape: f32[64,64], index: 3, kind: input, shape index: {}]
  %s4 = inlined_call_operand.vmem [shape: f32[2,64,16], index: 4, kind: output, shape index: {}]
  %s5 = sld [smem:[#allocation0]]
  $region49: #{tpu_custom_call.1} parent=0
    _
  %s7 = ssub.s32 1, %s5
  %s8 = scalar_select 0, %s7, %s5
  loop: start=0, step=1, limit=4
  $region2: #{tpu_custom_call.1} parent=0 // loop_pre_header
    _
  $region3: #{tpu_custom_call.1} parent=0 // loop_header
    %s10 = sphi 0, %s14
    %p11 = scmp.ge.s32.totalorder %s10, 4
    %s20 = sphi 0, %s22
    %s23 = sphi 0, %s20
    %s24 = sphi 0, %s23
    %s40 = sphi 0, %s24
    %s44 = sphi 0, %s44
    %s46 = sphi 0, %s44
    %s47 = sphi 0, %s46
    %s61 = sphi 0, %s47
    %s65 = sphi 0, %s65
    %s67 = sphi 0, %s65
    %s68 = sphi 0, %s67
    %s82 = sphi 0, %s68
    %s86 = sphi 0, %s86
    %s88 = sphi 0, %s86
    %s89 = sphi 0, %s88
    %s103 = sphi 0, %s89
    %s109 = sphi 0, %s111
    %s112 = sphi 0, %s109
    %s113 = sphi 0, %s112
    %s129 = sphi 0, %s113
  $region4: #{tpu_custom_call.1} parent=0 // loop_header_branch
    %13 = sbr.rel (%p11) target = $region8
  $region5: #{tpu_custom_call.1} parent=0 // loop_body
    %s15 = ssub.s32 %s10, 1
    %s16 = ssub.s32 %s10, 2
    %s17 = sadd.s32 %s10, 1
    %s18 = ssub.s32 %s10, %s17
    %p19 = scmp.eq.s32.totalorder %s18, 0
    %s21 = sadd.s32 %s20, 1
    %s22 = scalar_select %p19, %s20, %s21
    %p25 = pneg %p19
    %p26 = scmp.eq.s32.totalorder %s10, 1
    %p27 = por %p25, %p26
    %p28 = scmp.ne.s32.totalorder %s20, %s23
    %p29 = scmp.eq.s32.totalorder %s10, 0
    %p30 = por %p28, %p29
    %p31 = scmp.ne.s32.totalorder %s20, %s23
    %p32 = scmp.eq.s32.totalorder %s15, 1
    %p33 = por %p31, %p32
    %p34 = scmp.ne.s32.totalorder %s23, %s24
    %p35 = scmp.eq.s32.totalorder %s15, 0
    %p36 = por %p34, %p35
    %p37 = scmp.ne.s32.totalorder %s23, %s24
    %p38 = scmp.eq.s32.totalorder %s16, 1
    %p39 = por %p37, %p38
    %p41 = scmp.ne.s32.totalorder %s24, %s40
    %p42 = scmp.eq.s32.totalorder %s16, 0
    %p43 = por %p41, %p42
    %s45 = sadd.s32 %s44, 1
    %p48 = scmp.eq.s32.totalorder %s10, 1
    %p49 = scmp.ne.s32.totalorder %s44, %s46
    %p50 = scmp.eq.s32.totalorder %s10, 0
    %p51 = por %p49, %p50
    %p52 = scmp.ne.s32.totalorder %s44, %s46
    %p53 = scmp.eq.s32.totalorder %s15, 1
    %p54 = por %p52, %p53
    %p55 = scmp.ne.s32.totalorder %s46, %s47
    %p56 = scmp.eq.s32.totalorder %s15, 0
    %p57 = por %p55, %p56
    %p58 = scmp.ne.s32.totalorder %s46, %s47
    %p59 = scmp.eq.s32.totalorder %s16, 1
    %p60 = por %p58, %p59
    %p62 = scmp.ne.s32.totalorder %s47, %s61
    %p63 = scmp.eq.s32.totalorder %s16, 0
    %p64 = por %p62, %p63
    %s66 = sadd.s32 %s65, 1
    %p69 = scmp.eq.s32.totalorder %s10, 1
    %p70 = scmp.ne.s32.totalorder %s65, %s67
    %p71 = scmp.eq.s32.totalorder %s10, 0
    %p72 = por %p70, %p71
    %p73 = scmp.ne.s32.totalorder %s65, %s67
    %p74 = scmp.eq.s32.totalorder %s15, 1
    %p75 = por %p73, %p74
    %p76 = scmp.ne.s32.totalorder %s67, %s68
    %p77 = scmp.eq.s32.totalorder %s15, 0
    %p78 = por %p76, %p77
    %p79 = scmp.ne.s32.totalorder %s67, %s68
    %p80 = scmp.eq.s32.totalorder %s16, 1
    %p81 = por %p79, %p80
    %p83 = scmp.ne.s32.totalorder %s68, %s82
    %p84 = scmp.eq.s32.totalorder %s16, 0
    %p85 = por %p83, %p84
    %s87 = sadd.s32 %s86, 1
    %p90 = scmp.eq.s32.totalorder %s10, 1
    %p91 = scmp.ne.s32.totalorder %s86, %s88
    %p92 = scmp.eq.s32.totalorder %s10, 0
    %p93 = por %p91, %p92
    %p94 = scmp.ne.s32.totalorder %s86, %s88
    %p95 = scmp.eq.s32.totalorder %s15, 1
    %p96 = por %p94, %p95
    %p97 = scmp.ne.s32.totalorder %s88, %s89
    %p98 = scmp.eq.s32.totalorder %s15, 0
    %p99 = por %p97, %p98
    %p100 = scmp.ne.s32.totalorder %s88, %s89
    %p101 = scmp.eq.s32.totalorder %s16, 1
    %p102 = por %p100, %p101
    %p104 = scmp.ne.s32.totalorder %s89, %s103
    %p105 = scmp.eq.s32.totalorder %s16, 0
    %p106 = por %p104, %p105
    %s107 = ssub.s32 %s10, %s17
    %p108 = scmp.eq.s32.totalorder %s107, 0
    %s110 = sadd.s32 %s109, 1
    %s111 = scalar_select %p108, %s109, %s110
    %p114 = pneg %p108
    %p115 = scmp.eq.s32.totalorder %s10, 1
    %p116 = por %p114, %p115
    %p117 = scmp.ne.s32.totalorder %s109, %s112
    %p118 = scmp.eq.s32.totalorder %s10, 0
    %p119 = por %p117, %p118
    %p120 = scmp.ne.s32.totalorder %s109, %s112
    %p121 = scmp.eq.s32.totalorder %s15, 1
    %p122 = por %p120, %p121
    %p123 = scmp.ne.s32.totalorder %s112, %s113
    %p124 = scmp.eq.s32.totalorder %s15, 0
    %p125 = por %p123, %p124
    %p126 = scmp.ne.s32.totalorder %s112, %s113
    %p127 = scmp.eq.s32.totalorder %s16, 1
    %p128 = por %p126, %p127
    %p130 = scmp.ne.s32.totalorder %s113, %s129
    %p131 = scmp.eq.s32.totalorder %s16, 0
    %p132 = por %p130, %p131
    %p133 = scmp.le.s32.totalorder 1, %s10
    %p134 = scmp.lt.s32.totalorder %s10, 3
    %p135 = pnand %p133, %p134
    %p136 = pneg %p135
    // Predicated region
    $region9: #{tpu_custom_call.1} parent=5 // pred_check
      _
    $region10: #{tpu_custom_call.1} parent=5 // pred_check_branch
      %138 = sbr.rel (%p135) target = $region12
    $region11: #{tpu_custom_call.1} parent=5 // pred_region
      %s139 = ssub.s32 %s10, 1
      // Predicated region
      $region13: #{tpu_custom_call.1} parent=11 // pred_check
        %p140 = pneg %p57
      $region14: #{tpu_custom_call.1} parent=11 // pred_check_branch
        %142 = sbr.rel (%p140) target = $region16
      $region15: #{tpu_custom_call.1} parent=11 // pred_region
        _
      $region16: #{tpu_custom_call.1} parent=11 // pred_fallthru
        _
      // Predicated region
      $region17: #{tpu_custom_call.1} parent=11 // pred_check
        %p143 = pneg %p78
      $region18: #{tpu_custom_call.1} parent=11 // pred_check_branch
        %145 = sbr.rel (%p143) target = $region20
      $region19: #{tpu_custom_call.1} parent=11 // pred_region
        _
      $region20: #{tpu_custom_call.1} parent=11 // pred_fallthru
        _
      // Predicated region
      $region21: #{tpu_custom_call.1} parent=11 // pred_check
        %p146 = pneg %p99
      $region22: #{tpu_custom_call.1} parent=11 // pred_check_branch
        %148 = sbr.rel (%p146) target = $region24
      $region23: #{tpu_custom_call.1} parent=11 // pred_region
        _
      $region24: #{tpu_custom_call.1} parent=11 // pred_fallthru
        _
    $region12: #{tpu_custom_call.1} parent=5 // pred_fallthru
      _
    %p149 = scmp.lt.s32.totalorder %s10, 2
    // Predicated region
    $region25: #{tpu_custom_call.1} parent=5 // pred_check
      %p150 = pneg %p149
    $region26: #{tpu_custom_call.1} parent=5 // pred_check_branch
      %152 = sbr.rel (%p150) target = $region28
    $region27: #{tpu_custom_call.1} parent=5 // pred_region
      // Predicated region
      $region29: #{tpu_custom_call.1} parent=27 // pred_check
        %p153 = pneg %p30
      $region30: #{tpu_custom_call.1} parent=27 // pred_check_branch
        %155 = sbr.rel (%p153) target = $region32
      $region31: #{tpu_custom_call.1} parent=27 // pred_region
        %p156 = scmp.lt.s32.totalorder %s10, 1
        %s157 = scalar_select %p156, %s10, 1
        %s158 = smul.addr %s157, 8
        %s159 = smul.addr %s158, 8
        %s160 = scalar_lea.vmem %s0, %s159
      $region32: #{tpu_custom_call.1} parent=27 // pred_fallthru
        _
    $region28: #{tpu_custom_call.1} parent=5 // pred_fallthru
      _
    %p161 = scmp.le.s32.totalorder 1, %s10
    %p162 = scmp.lt.s32.totalorder %s10, 3
    %p163 = pnand %p161, %p162
    %p164 = pneg %p163
    // Predicated region
    $region33: #{tpu_custom_call.1} parent=5 // pred_check
      _
    $region34: #{tpu_custom_call.1} parent=5 // pred_check_branch
      %166 = sbr.rel (%p163) target = $region36
    $region35: #{tpu_custom_call.1} parent=5 // pred_region
      %s167 = ssub.s32 %s10, 1
      %p168 = scmp.lt.s32.totalorder %s15, 1
      %s169 = scalar_select %p168, %s15, 1
      %s170 = smul.addr %s169, 8
      %s171 = smul.addr %s170, 8
      %s172 = scalar_lea.vmem %s0, %s171
      %p173 = pneg %p36
      %p174 = pneg %p33
      %p175 = pneg %p57
      %p176 = pneg %p54
      %p177 = pneg %p78
      %p178 = pneg %p75
      %p179 = pneg %p99
      %p180 = pneg %p96
      %p181 = pneg %p125
      %p182 = pneg %p122
      %p183 = scmp.lt.s32.totalorder %s15, 1
      %s184 = scalar_select %p183, %s15, 1
      %s185 = smul.addr %s184, 8
      %s186 = smul.addr %s185, 8
      %s187 = scalar_lea.vmem %s4, %s186
      %p188 = scmp.lt.s32.totalorder %s15, 1
      %s189 = scalar_select %p188, %s15, 1
      %s190 = smul.addr %s189, 8
      %s191 = smul.addr %s190, 8
      %s192 = scalar_lea.vmem %s0, %s191
      %p193 = scmp.lt.s32.totalorder %s15, 1
      %s194 = scalar_select %p193, %s15, 1
      %s195 = smul.addr %s194, 8
      %s196 = smul.addr %s195, 8
      %s197 = scalar_lea.vmem %s4, %s196
      %v198 = vld [vmem:[%s1] sm:$0xff]
      %v199 = vld [vmem:[%s1 + $0x8] sm:$0xff]
      %v200 = vld [vmem:[%s1 + $0x10] sm:$0xff]
      %v201 = vld [vmem:[%s1 + $0x18] sm:$0xff]
      %v202 = vld [vmem:[%s1 + $0x20] sm:$0xff]
      %v203 = vld [vmem:[%s1 + $0x28] sm:$0xff]
      %v204 = vld [vmem:[%s1 + $0x30] sm:$0xff]
      %v205 = vld [vmem:[%s1 + $0x38] sm:$0xff]
      %v206 = vld [vmem:[%s2] sm:$0xff]
      %v207 = vld [vmem:[%s2 + $0x8] sm:$0xff]
      %v208 = vld [vmem:[%s2 + $0x10] sm:$0xff]
      %v209 = vld [vmem:[%s2 + $0x18] sm:$0xff]
      %v210 = vld [vmem:[%s2 + $0x20] sm:$0xff]
      %v211 = vld [vmem:[%s2 + $0x28] sm:$0xff]
      %v212 = vld [vmem:[%s2 + $0x30] sm:$0xff]
      %v213 = vld [vmem:[%s2 + $0x38] sm:$0xff]
      %v214 = vld [vmem:[%s3] sm:$0xff]
      %v215 = vld [vmem:[%s3 + $0x8] sm:$0xff]
      %v216 = vld [vmem:[%s3 + $0x10] sm:$0xff]
      %v217 = vld [vmem:[%s3 + $0x18] sm:$0xff]
      %v218 = vld [vmem:[%s3 + $0x20] sm:$0xff]
      %v219 = vld [vmem:[%s3 + $0x28] sm:$0xff]
      %v220 = vld [vmem:[%s3 + $0x30] sm:$0xff]
      %v221 = vld [vmem:[%s3 + $0x38] sm:$0xff]
      %v222 = vld [vmem:[%s192] sm:$0xff]
      %v223 = vld [vmem:[%s192 + $0x8] sm:$0xff]
      %v224 = vld [vmem:[%s192 + $0x10] sm:$0xff]
      %v225 = vld [vmem:[%s192 + $0x18] sm:$0xff]
      %v226 = vld [vmem:[%s192 + $0x20] sm:$0xff]
      %v227 = vld [vmem:[%s192 + $0x28] sm:$0xff]
      %v228 = vld [vmem:[%s192 + $0x30] sm:$0xff]
      %v229 = vld [vmem:[%s192 + $0x38] sm:$0xff]
      %vm230 = vcmask 130048
      %v232 = vsel %vm230, %v222, 0
      %v235 = vsel %vm230, %v223, 0
      %v238 = vsel %vm230, %v224, 0
      %v241 = vsel %vm230, %v225, 0
      %v244 = vsel %vm230, %v226, 0
      %v247 = vsel %vm230, %v227, 0
      %v250 = vsel %vm230, %v228, 0
      %v253 = vsel %vm230, %v229, 0
      %255 = vmatprep.subr.mxu0 0.0
      %256 = vmatpush1.xpose.msra.mxu0 0.0
      %257 = vmatprep.subr.mxu0 0.0
      %258 = vmatpush1.xpose.msra.mxu0 0.0
      %259 = vmatprep.subr.mxu0 0.0
      %260 = vmatpush1.xpose.msra.mxu0 0.0
      %261 = vmatprep.subr.mxu0 0.0
      %262 = vmatpush1.xpose.msra.mxu0 0.0
      %263 = vmatprep.subr.mxu0 0.0
      %264 = vmatpush1.xpose.msra.mxu0 0.0
      %265 = vmatprep.subr.mxu0 0.0
      %266 = vmatpush1.xpose.msra.mxu0 0.0
      %267 = vmatprep.subr.mxu0 0.0
      %268 = vmatpush1.xpose.msra.mxu0 0.0
      %269 = vmatprep.subr.mxu0 0.0
      %270 = vmatpush1.xpose.msra.mxu0 0.0
      %271 = vmatprep.subr.mxu0 0.0
      %272 = vmatpush1.xpose.msra.mxu0 %v253
      %273 = vmatprep.subr.mxu0 0.0
      %274 = vmatpush1.xpose.msra.mxu0 %v250
      %275 = vmatprep.subr.mxu0 0.0
      %276 = vmatpush1.xpose.msra.mxu0 %v247
      %277 = vmatprep.subr.mxu0 0.0
      %278 = vmatpush1.xpose.msra.mxu0 %v244
      %279 = vmatprep.subr.mxu0 0.0
      %280 = vmatpush1.xpose.msra.mxu0 %v241
      %281 = vmatprep.subr.mxu0 0.0
      %282 = vmatpush1.xpose.msra.mxu0 %v238
      %283 = vmatprep.subr.mxu0 0.0
      %284 = vmatpush1.xpose.msra.mxu0 %v235
      %285 = vmatprep.subr.mxu0 0.0
      %286 = vmatpush1.xpose.msra.mxu0 %v232
      %287 = vmatprep.subr.mxu0 0.0
      %288 = vmatpush2.xpose.msra.mxu0 0.0
      %289 = vmatprep.subr.mxu0 0.0
      %290 = vmatpush2.xpose.msra.mxu0 0.0
      %291 = vmatprep.subr.mxu0 0.0
      %292 = vmatpush2.xpose.msra.mxu0 0.0
      %293 = vmatprep.subr.mxu0 0.0
      %294 = vmatpush2.xpose.msra.mxu0 0.0
      %295 = vmatprep.subr.mxu0 0.0
      %296 = vmatpush2.xpose.msra.mxu0 0.0
      %297 = vmatprep.subr.mxu0 0.0
      %298 = vmatpush2.xpose.msra.mxu0 0.0
      %299 = vmatprep.subr.mxu0 0.0
      %300 = vmatpush2.xpose.msra.mxu0 0.0
      %301 = vmatprep.subr.mxu0 0.0
      %302 = vmatpush2.xpose.msra.mxu0 0.0
      %303 = vmatprep.subr.mxu0 0.0
      %304 = vmatpush2.xpose.msra.mxu0 0.0
      %305 = vmatprep.subr.mxu0 0.0
      %306 = vmatpush2.xpose.msra.mxu0 0.0
      %307 = vmatprep.subr.mxu0 0.0
      %308 = vmatpush2.xpose.msra.mxu0 0.0
      %309 = vmatprep.subr.mxu0 0.0
      %310 = vmatpush2.xpose.msra.mxu0 0.0
      %311 = vmatprep.subr.mxu0 0.0
      %312 = vmatpush2.xpose.msra.mxu0 0.0
      %313 = vmatprep.subr.mxu0 0.0
      %314 = vmatpush2.xpose.msra.mxu0 0.0
      %315 = vmatprep.subr.mxu0 0.0
      %316 = vmatpush2.xpose.msra.mxu0 0.0
      %317 = vmatprep.subr.mxu0 0.0
      %318 = vmatpush2.xpose.msra.mxu0 0.0
      %319 = vmatprep.mubr.f32.mxu0 0.0
      %320 = vmatmul.mubr.f32.gmra.mxu0 %v232
      %v321 = vpop.f32.mrf.mxu0
      %v322 = vadd.f32 0.0, %v321
      %v323 = vpop.f32.mrf.mxu0
      %324 = vmatprep.mubr.f32.mxu0 0.0
      %325 = vmatmul.mubr.f32.gmra.mxu0 %v235
      %v326 = vpop.f32.mrf.mxu0
      %v327 = vadd.f32 0.0, %v326
      %v328 = vpop.f32.mrf.mxu0
      %329 = vmatprep.mubr.f32.mxu0 0.0
      %330 = vmatmul.mubr.f32.gmra.mxu0 %v238
      %v331 = vpop.f32.mrf.mxu0
      %v332 = vadd.f32 0.0, %v331
      %v333 = vpop.f32.mrf.mxu0
      %334 = vmatprep.mubr.f32.mxu0 0.0
      %335 = vmatmul.mubr.f32.gmra.mxu0 %v241
      %v336 = vpop.f32.mrf.mxu0
      %v337 = vadd.f32 0.0, %v336
      %v338 = vpop.f32.mrf.mxu0
      %339 = vmatprep.mubr.f32.mxu0 0.0
      %340 = vmatmul.mubr.f32.gmra.mxu0 %v244
      %v341 = vpop.f32.mrf.mxu0
      %v342 = vadd.f32 0.0, %v341
      %v343 = vpop.f32.mrf.mxu0
      %344 = vmatprep.mubr.f32.mxu0 0.0
      %345 = vmatmul.mubr.f32.gmra.mxu0 %v247
      %v346 = vpop.f32.mrf.mxu0
      %v347 = vadd.f32 0.0, %v346
      %v348 = vpop.f32.mrf.mxu0
      %349 = vmatprep.mubr.f32.mxu0 0.0
      %350 = vmatmul.mubr.f32.gmra.mxu0 %v250
      %v351 = vpop.f32.mrf.mxu0
      %v352 = vadd.f32 0.0, %v351
      %v353 = vpop.f32.mrf.mxu0
      %354 = vmatprep.mubr.f32.mxu0 0.0
      %355 = vmatmul.mubr.f32.gmra.mxu0 %v253
      %v356 = vpop.f32.mrf.mxu0
      %v357 = vadd.f32 0.0, %v356
      %v358 = vpop.f32.mrf.mxu0
      %359 = vdwg.mxu0
      %v360 = vmul.f32 %v322, 0.35355338
      %v361 = vmul.f32 %v327, 0.35355338
      %v362 = vmul.f32 %v332, 0.35355338
      %v363 = vmul.f32 %v337, 0.35355338
      %v364 = vmul.f32 %v342, 0.35355338
      %v365 = vmul.f32 %v347, 0.35355338
      %v366 = vmul.f32 %v352, 0.35355338
      %v367 = vmul.f32 %v357, 0.35355338
      %v368 = vadd.f32 %v360, %v214
      %v369 = vadd.f32 %v361, %v215
      %v370 = vadd.f32 %v362, %v216
      %v371 = vadd.f32 %v363, %v217
      %v372 = vadd.f32 %v364, %v218
      %v373 = vadd.f32 %v365, %v219
      %v374 = vadd.f32 %v366, %v220
      %v375 = vadd.f32 %v367, %v221
      %vm376 = vcmask 523264
      %v377 = vsel %vm376, %v368, -inf
      %378 = vmax.xlane.f32.xlu0 %v377
      %v379 = vpop.xlane.xlu0 %378
      %v380 = vsel %vm376, %v369, -inf
      %381 = vmax.xlane.f32.xlu0 %v380
      %v382 = vpop.xlane.xlu0 %381
      %v383 = vsel %vm376, %v370, -inf
      %384 = vmax.xlane.f32.xlu0 %v383
      %v385 = vpop.xlane.xlu0 %384
      %v386 = vsel %vm376, %v371, -inf
      %387 = vmax.xlane.f32.xlu0 %v386
      %v388 = vpop.xlane.xlu0 %387
      %v389 = vsel %vm376, %v372, -inf
      %390 = vmax.xlane.f32.xlu0 %v389
      %v391 = vpop.xlane.xlu0 %390
      %v392 = vsel %vm376, %v373, -inf
      %393 = vmax.xlane.f32.xlu0 %v392
      %v394 = vpop.xlane.xlu0 %393
      %v395 = vsel %vm376, %v374, -inf
      %396 = vmax.xlane.f32.xlu0 %v395
      %v397 = vpop.xlane.xlu0 %396
      %v398 = vsel %vm376, %v375, -inf
      %399 = vmax.xlane.f32.xlu0 %v398
      %v400 = vpop.xlane.xlu0 %399
      %v401 = vsub.f32 %v368, %v379
      %v402 = vsub.f32 %v369, %v382
      %v403 = vsub.f32 %v370, %v385
      %v404 = vsub.f32 %v371, %v388
      %v405 = vsub.f32 %v372, %v391
      %v406 = vsub.f32 %v373, %v394
      %v407 = vsub.f32 %v374, %v397
      %v408 = vsub.f32 %v375, %v400
      %v409 = vmul.f32 %v401, 1.442695
      %v410 = vpow.pop %v409
      %v411 = vmul.f32 %v402, 1.442695
      %v412 = vpow.pop %v411
      %v413 = vmul.f32 %v403, 1.442695
      %v414 = vpow.pop %v413
      %v415 = vmul.f32 %v404, 1.442695
      %v416 = vpow.pop %v415
      %v417 = vmul.f32 %v405, 1.442695
      %v418 = vpow.pop %v417
      %v419 = vmul.f32 %v406, 1.442695
      %v420 = vpow.pop %v419
      %v421 = vmul.f32 %v407, 1.442695
      %v422 = vpow.pop %v421
      %v423 = vmul.f32 %v408, 1.442695
      %v424 = vpow.pop %v423
      %v425 = vsel %vm376, %v410, 0.0
      %426 = vadd.xlane.f32.xlu0 %v425
      %v427 = vpop.xlane.xlu0 %426
      %v428 = vsel %vm376, %v412, 0.0
      %429 = vadd.xlane.f32.xlu0 %v428
      %v430 = vpop.xlane.xlu0 %429
      %v431 = vsel %vm376, %v414, 0.0
      %432 = vadd.xlane.f32.xlu0 %v431
      %v433 = vpop.xlane.xlu0 %432
      %v434 = vsel %vm376, %v416, 0.0
      %435 = vadd.xlane.f32.xlu0 %v434
      %v436 = vpop.xlane.xlu0 %435
      %v437 = vsel %vm376, %v418, 0.0
      %438 = vadd.xlane.f32.xlu0 %v437
      %v439 = vpop.xlane.xlu0 %438
      %v440 = vsel %vm376, %v420, 0.0
      %441 = vadd.xlane.f32.xlu0 %v440
      %v442 = vpop.xlane.xlu0 %441
      %v443 = vsel %vm376, %v422, 0.0
      %444 = vadd.xlane.f32.xlu0 %v443
      %v445 = vpop.xlane.xlu0 %444
      %v446 = vsel %vm376, %v424, 0.0
      %447 = vadd.xlane.f32.xlu0 %v446
      %v448 = vpop.xlane.xlu0 %447
      %v449 = vrcp.pop %v427
      %v450 = vrcp.pop %v430
      %v451 = vrcp.pop %v433
      %v452 = vrcp.pop %v436
      %v453 = vrcp.pop %v439
      %v454 = vrcp.pop %v442
      %v455 = vrcp.pop %v445
      %v456 = vrcp.pop %v448
      %v457 = vmul.f32 %v410, %v449
      %v458 = vmul.f32 %v412, %v450
      %v459 = vmul.f32 %v414, %v451
      %v460 = vmul.f32 %v416, %v452
      %v461 = vmul.f32 %v418, %v453
      %v462 = vmul.f32 %v420, %v454
      %v463 = vmul.f32 %v422, %v455
      %v464 = vmul.f32 %v424, %v456
      %v466 = vsel %vm376, %v457, 0
      %v469 = vsel %vm376, %v458, 0
      %v472 = vsel %vm376, %v459, 0
      %v475 = vsel %vm376, %v460, 0
      %v478 = vsel %vm376, %v461, 0
      %v481 = vsel %vm376, %v462, 0
      %v484 = vsel %vm376, %v463, 0
      %v487 = vsel %vm376, %v464, 0
      %489 = vmatprep.subr.mxu0 0.0
      %490 = vmatpush1.msra.mxu0 0.0
      %491 = vmatprep.subr.mxu0 0.0
      %492 = vmatpush1.msra.mxu0 0.0
      %493 = vmatprep.subr.mxu0 0.0
      %494 = vmatpush1.msra.mxu0 0.0
      %495 = vmatprep.subr.mxu0 0.0
      %496 = vmatpush1.msra.mxu0 0.0
      %497 = vmatprep.subr.mxu0 0.0
      %498 = vmatpush1.msra.mxu0 0.0
      %499 = vmatprep.subr.mxu0 0.0
      %500 = vmatpush1.msra.mxu0 0.0
      %501 = vmatprep.subr.mxu0 0.0
      %502 = vmatpush1.msra.mxu0 0.0
      %503 = vmatprep.subr.mxu0 0.0
      %504 = vmatpush1.msra.mxu0 0.0
      %505 = vmatprep.subr.mxu0 0.0
      %506 = vmatpush1.msra.mxu0 %v229
      %507 = vmatprep.subr.mxu0 0.0
      %508 = vmatpush1.msra.mxu0 %v228
      %509 = vmatprep.subr.mxu0 0.0
      %510 = vmatpush1.msra.mxu0 %v227
      %511 = vmatprep.subr.mxu0 0.0
      %512 = vmatpush1.msra.mxu0 %v226
      %513 = vmatprep.subr.mxu0 0.0
      %514 = vmatpush1.msra.mxu0 %v225
      %515 = vmatprep.subr.mxu0 0.0
      %516 = vmatpush1.msra.mxu0 %v224
      %517 = vmatprep.subr.mxu0 0.0
      %518 = vmatpush1.msra.mxu0 %v223
      %519 = vmatprep.subr.mxu0 0.0
      %520 = vmatpush1.msra.mxu0 %v222
      %521 = vmatprep.subr.mxu0 0.0
      %522 = vmatpush2.msra.mxu0 0.0
      %523 = vmatprep.subr.mxu0 0.0
      %524 = vmatpush2.msra.mxu0 0.0
      %525 = vmatprep.subr.mxu0 0.0
      %526 = vmatpush2.msra.mxu0 0.0
      %527 = vmatprep.subr.mxu0 0.0
      %528 = vmatpush2.msra.mxu0 0.0
      %529 = vmatprep.subr.mxu0 0.0
      %530 = vmatpush2.msra.mxu0 0.0
      %531 = vmatprep.subr.mxu0 0.0
      %532 = vmatpush2.msra.mxu0 0.0
      %533 = vmatprep.subr.mxu0 0.0
      %534 = vmatpush2.msra.mxu0 0.0
      %535 = vmatprep.subr.mxu0 0.0
      %536 = vmatpush2.msra.mxu0 0.0
      %537 = vmatprep.subr.mxu0 0.0
      %538 = vmatpush2.msra.mxu0 0.0
      %539 = vmatprep.subr.mxu0 0.0
      %540 = vmatpush2.msra.mxu0 0.0
      %541 = vmatprep.subr.mxu0 0.0
      %542 = vmatpush2.msra.mxu0 0.0
      %543 = vmatprep.subr.mxu0 0.0
      %544 = vmatpush2.msra.mxu0 0.0
      %545 = vmatprep.subr.mxu0 0.0
      %546 = vmatpush2.msra.mxu0 0.0
      %547 = vmatprep.subr.mxu0 0.0
      %548 = vmatpush2.msra.mxu0 0.0
      %549 = vmatprep.subr.mxu0 0.0
      %550 = vmatpush2.msra.mxu0 0.0
      %551 = vmatprep.subr.mxu0 0.0
      %552 = vmatpush2.msra.mxu0 0.0
      %553 = vmatprep.mubr.f32.mxu0 0.0
      %554 = vmatmul.mubr.f32.gmra.mxu0 %v466
      %v555 = vpop.f32.mrf.mxu0
      %v556 = vadd.f32 0.0, %v555
      %v557 = vpop.f32.mrf.mxu0
      %558 = vmatprep.mubr.f32.mxu0 0.0
      %559 = vmatmul.mubr.f32.gmra.mxu0 %v469
      %v560 = vpop.f32.mrf.mxu0
      %v561 = vadd.f32 0.0, %v560
      %v562 = vpop.f32.mrf.mxu0
      %563 = vmatprep.mubr.f32.mxu0 0.0
      %564 = vmatmul.mubr.f32.gmra.mxu0 %v472
      %v565 = vpop.f32.mrf.mxu0
      %v566 = vadd.f32 0.0, %v565
      %v567 = vpop.f32.mrf.mxu0
      %568 = vmatprep.mubr.f32.mxu0 0.0
      %569 = vmatmul.mubr.f32.gmra.mxu0 %v475
      %v570 = vpop.f32.mrf.mxu0
      %v571 = vadd.f32 0.0, %v570
      %v572 = vpop.f32.mrf.mxu0
      %573 = vmatprep.mubr.f32.mxu0 0.0
      %574 = vmatmul.mubr.f32.gmra.mxu0 %v478
      %v575 = vpop.f32.mrf.mxu0
      %v576 = vadd.f32 0.0, %v575
      %v577 = vpop.f32.mrf.mxu0
      %578 = vmatprep.mubr.f32.mxu0 0.0
      %579 = vmatmul.mubr.f32.gmra.mxu0 %v481
      %v580 = vpop.f32.mrf.mxu0
      %v581 = vadd.f32 0.0, %v580
      %v582 = vpop.f32.mrf.mxu0
      %583 = vmatprep.mubr.f32.mxu0 0.0
      %584 = vmatmul.mubr.f32.gmra.mxu0 %v484
      %v585 = vpop.f32.mrf.mxu0
      %v586 = vadd.f32 0.0, %v585
      %v587 = vpop.f32.mrf.mxu0
      %588 = vmatprep.mubr.f32.mxu0 0.0
      %589 = vmatmul.mubr.f32.gmra.mxu0 %v487
      %v590 = vpop.f32.mrf.mxu0
      %v591 = vadd.f32 0.0, %v590
      %v592 = vpop.f32.mrf.mxu0
      %593 = vdwg.mxu0
      %v595 = vsel %vm376, %v198, 0
      %v598 = vsel %vm376, %v199, 0
      %v601 = vsel %vm376, %v200, 0
      %v604 = vsel %vm376, %v201, 0
      %v607 = vsel %vm376, %v202, 0
      %v610 = vsel %vm376, %v203, 0
      %v613 = vsel %vm376, %v204, 0
      %v616 = vsel %vm376, %v205, 0
      %618 = vmatprep.subr.mxu0 0.0
      %619 = vmatpush1.msra.mxu0 0.0
      %620 = vmatprep.subr.mxu0 0.0
      %621 = vmatpush1.msra.mxu0 0.0
      %622 = vmatprep.subr.mxu0 0.0
      %623 = vmatpush1.msra.mxu0 0.0
      %624 = vmatprep.subr.mxu0 0.0
      %625 = vmatpush1.msra.mxu0 0.0
      %626 = vmatprep.subr.mxu0 0.0
      %627 = vmatpush1.msra.mxu0 0.0
      %628 = vmatprep.subr.mxu0 0.0
      %629 = vmatpush1.msra.mxu0 0.0
      %630 = vmatprep.subr.mxu0 0.0
      %631 = vmatpush1.msra.mxu0 0.0
      %632 = vmatprep.subr.mxu0 0.0
      %633 = vmatpush1.msra.mxu0 0.0
      %634 = vmatprep.subr.mxu0 0.0
      %635 = vmatpush1.msra.mxu0 %v591
      %636 = vmatprep.subr.mxu0 0.0
      %637 = vmatpush1.msra.mxu0 %v586
      %638 = vmatprep.subr.mxu0 0.0
      %639 = vmatpush1.msra.mxu0 %v581
      %640 = vmatprep.subr.mxu0 0.0
      %641 = vmatpush1.msra.mxu0 %v576
      %642 = vmatprep.subr.mxu0 0.0
      %643 = vmatpush1.msra.mxu0 %v571
      %644 = vmatprep.subr.mxu0 0.0
      %645 = vmatpush1.msra.mxu0 %v566
      %646 = vmatprep.subr.mxu0 0.0
      %647 = vmatpush1.msra.mxu0 %v561
      %648 = vmatprep.subr.mxu0 0.0
      %649 = vmatpush1.msra.mxu0 %v556
      %650 = vmatprep.subr.mxu0 0.0
      %651 = vmatpush2.msra.mxu0 0.0
      %652 = vmatprep.subr.mxu0 0.0
      %653 = vmatpush2.msra.mxu0 0.0
      %654 = vmatprep.subr.mxu0 0.0
      %655 = vmatpush2.msra.mxu0 0.0
      %656 = vmatprep.subr.mxu0 0.0
      %657 = vmatpush2.msra.mxu0 0.0
      %658 = vmatprep.subr.mxu0 0.0
      %659 = vmatpush2.msra.mxu0 0.0
      %660 = vmatprep.subr.mxu0 0.0
      %661 = vmatpush2.msra.mxu0 0.0
      %662 = vmatprep.subr.mxu0 0.0
      %663 = vmatpush2.msra.mxu0 0.0
      %664 = vmatprep.subr.mxu0 0.0
      %665 = vmatpush2.msra.mxu0 0.0
      %666 = vmatprep.subr.mxu0 0.0
      %667 = vmatpush2.msra.mxu0 0.0
      %668 = vmatprep.subr.mxu0 0.0
      %669 = vmatpush2.msra.mxu0 0.0
      %670 = vmatprep.subr.mxu0 0.0
      %671 = vmatpush2.msra.mxu0 0.0
      %672 = vmatprep.subr.mxu0 0.0
      %673 = vmatpush2.msra.mxu0 0.0
      %674 = vmatprep.subr.mxu0 0.0
      %675 = vmatpush2.msra.mxu0 0.0
      %676 = vmatprep.subr.mxu0 0.0
      %677 = vmatpush2.msra.mxu0 0.0
      %678 = vmatprep.subr.mxu0 0.0
      %679 = vmatpush2.msra.mxu0 0.0
      %680 = vmatprep.subr.mxu0 0.0
      %681 = vmatpush2.msra.mxu0 0.0
      %682 = vmatprep.mubr.f32.mxu0 0.0
      %683 = vmatmul.mubr.f32.gmra.mxu0 %v595
      %v684 = vpop.f32.mrf.mxu0
      %v685 = vadd.f32 %v206, %v684
      %v686 = vpop.f32.mrf.mxu0
      %687 = vmatprep.mubr.f32.mxu0 0.0
      %688 = vmatmul.mubr.f32.gmra.mxu0 %v598
      %v689 = vpop.f32.mrf.mxu0
      %v690 = vadd.f32 %v207, %v689
      %v691 = vpop.f32.mrf.mxu0
      %692 = vmatprep.mubr.f32.mxu0 0.0
      %693 = vmatmul.mubr.f32.gmra.mxu0 %v601
      %v694 = vpop.f32.mrf.mxu0
      %v695 = vadd.f32 %v208, %v694
      %v696 = vpop.f32.mrf.mxu0
      %697 = vmatprep.mubr.f32.mxu0 0.0
      %698 = vmatmul.mubr.f32.gmra.mxu0 %v604
      %v699 = vpop.f32.mrf.mxu0
      %v700 = vadd.f32 %v209, %v699
      %v701 = vpop.f32.mrf.mxu0
      %702 = vmatprep.mubr.f32.mxu0 0.0
      %703 = vmatmul.mubr.f32.gmra.mxu0 %v607
      %v704 = vpop.f32.mrf.mxu0
      %v705 = vadd.f32 %v210, %v704
      %v706 = vpop.f32.mrf.mxu0
      %707 = vmatprep.mubr.f32.mxu0 0.0
      %708 = vmatmul.mubr.f32.gmra.mxu0 %v610
      %v709 = vpop.f32.mrf.mxu0
      %v710 = vadd.f32 %v211, %v709
      %v711 = vpop.f32.mrf.mxu0
      %712 = vmatprep.mubr.f32.mxu0 0.0
      %713 = vmatmul.mubr.f32.gmra.mxu0 %v613
      %v714 = vpop.f32.mrf.mxu0
      %v715 = vadd.f32 %v212, %v714
      %v716 = vpop.f32.mrf.mxu0
      %717 = vmatprep.mubr.f32.mxu0 0.0
      %718 = vmatmul.mubr.f32.gmra.mxu0 %v616
      %v719 = vpop.f32.mrf.mxu0
      %v720 = vadd.f32 %v213, %v719
      %v721 = vpop.f32.mrf.mxu0
      %722 = vdwg.mxu0
      %723 = vst.msk [vmem:[%s197] sm:$0xff] %vm230, %v685
      %724 = vst.msk [vmem:[%s197 + $0x8] sm:$0xff] %vm230, %v690
      %725 = vst.msk [vmem:[%s197 + $0x10] sm:$0xff] %vm230, %v695
      %726 = vst.msk [vmem:[%s197 + $0x18] sm:$0xff] %vm230, %v700
      %727 = vst.msk [vmem:[%s197 + $0x20] sm:$0xff] %vm230, %v705
      %728 = vst.msk [vmem:[%s197 + $0x28] sm:$0xff] %vm230, %v710
      %729 = vst.msk [vmem:[%s197 + $0x30] sm:$0xff] %vm230, %v715
      %730 = vst.msk [vmem:[%s197 + $0x38] sm:$0xff] %vm230, %v720
      %p731 = scmp.lt.s32.totalorder %s15, 1
      %s732 = scalar_select %p731, %s15, 1
      %s733 = smul.addr %s732, 8
      %s734 = smul.addr %s733, 8
      %s735 = scalar_lea.vmem %s4, %s734
      // Predicated region
      $region37: #{tpu_custom_call.1} parent=35 // pred_check
        %p736 = pneg %p122
      $region38: #{tpu_custom_call.1} parent=35 // pred_check_branch
        %738 = sbr.rel (%p736) target = $region40
      $region39: #{tpu_custom_call.1} parent=35 // pred_region
        _
      $region40: #{tpu_custom_call.1} parent=35 // pred_fallthru
        _
    $region36: #{tpu_custom_call.1} parent=5 // pred_fallthru
      _
    %p739 = scmp.le.s32.totalorder 2, %s10
    // Predicated region
    $region41: #{tpu_custom_call.1} parent=5 // pred_check
      %p740 = pneg %p739
    $region42: #{tpu_custom_call.1} parent=5 // pred_check_branch
      %742 = sbr.rel (%p740) target = $region44
    $region43: #{tpu_custom_call.1} parent=5 // pred_region
      %s743 = ssub.s32 %s10, 2
      // Predicated region
      $region45: #{tpu_custom_call.1} parent=43 // pred_check
        %p744 = pneg %p128
      $region46: #{tpu_custom_call.1} parent=43 // pred_check_branch
        %746 = sbr.rel (%p744) target = $region48
      $region47: #{tpu_custom_call.1} parent=43 // pred_region
        %p747 = scmp.lt.s32.totalorder %s16, 1
        %s748 = scalar_select %p747, %s16, 1
        %s749 = smul.addr %s748, 8
        %s750 = smul.addr %s749, 8
        %s751 = scalar_lea.vmem %s4, %s750
      $region48: #{tpu_custom_call.1} parent=43 // pred_fallthru
        _
    $region44: #{tpu_custom_call.1} parent=5 // pred_fallthru
      _
  $region6: #{tpu_custom_call.1} parent=0 // loop_footer
    %s14 = sadd.s32 1, %s10
  $region7: #{tpu_custom_call.1} parent=0 // loop_footer_branch
    %9 = sbr.rel target = $region3
  $region8: #{tpu_custom_call.1} parent=0 // loop_exit
    _

</llo_original>
